<compile_context>
chip_gen: v7x
topology: tpu7x:2x2x1
jax: 0.10.0
libtpu: 0.0.40
codegen_flags: <defaults>
</compile_context>

<pallas_src>
import functools

import numpy as np
import jax
import jax.numpy as jnp
from jax.experimental import pallas as pl
from jax.experimental.pallas import tpu as pltpu

# ---------------------------------------------------------------------------
# Config (small, consistent with the module's forward).
# ---------------------------------------------------------------------------
B = 2          # batch
C_IN = 1       # raw waveform channels
L = 64         # raw waveform length
K = 8          # conv kernel size == stride (non-overlapping patches)
D = 32         # feature dim
T = L // K     # seq_len after encoder
MASK_RATE = 0.1
MASK_SPAN = 6
NUM_NEG = 20
TEMP = 0.1
LANE = 128     # lane-dense output slab width (features | logits | pad)


# ---------------------------------------------------------------------------
# The fused kernel: one grid step == one batch element.
# ---------------------------------------------------------------------------
def _fused_kernel(patches_ref, wc_ref, bc_ref, mask_ref, memb_ref,
                  wt_ref, bt_ref, g3_ref, fneg_ref, out_ref, *, inv_temp):
    Tt = patches_ref.shape[1]
    Dd = wc_ref.shape[1]
    P = fneg_ref.shape[2]
    lane = out_ref.shape[2]

    # 1) feature encoder: Conv1d(Cin->D, k=K, stride=K) as a patch matmul + bias + ReLU.
    #    bf16 MXU operands, f32 accumulate; epilogue in f32 (v5e has no bf16 VPU).
    feats = jnp.dot(patches_ref[0], wc_ref[...],
                    preferred_element_type=jnp.float32)
    feats = jnp.maximum(feats + bc_ref[...], 0.0)                    # (T, D) f32 == features_unmask

    # 2) "transformer": masked positions -> mask embedding, then Linear(D, D).
    m = mask_ref[0]                                                  # (T, 1) f32 in {0,1}
    x = jnp.where(m > 0.5, memb_ref[...], feats)                     # (T, D)
    ctx = jnp.dot(x.astype(jnp.bfloat16), wt_ref[...],
                  preferred_element_type=jnp.float32) + bt_ref[...]  # (T, D) f32 (== context[..., 1:])

    # 3) anchor/negative dot products as ONE f32 MXU matmul; the sampled negatives
    #    are "gathered" with an exact one-hot contraction (no dynamic gather).
    S = jnp.dot(feats, feats.T, preferred_element_type=jnp.float32)  # (T, T)
    g = g3_ref[0]                                                    # (T, num, T) one-hot of neg inds
    neg_dots = jnp.sum(g * S[:, None, :], axis=-1)                   # (T, num)
    # squared norms of every feature row, lane-oriented, read off S's diagonal
    r = jax.lax.broadcasted_iota(jnp.int32, (Tt, Tt), 0)
    c = jax.lax.broadcasted_iota(jnp.int32, (Tt, Tt), 1)
    n2_lane = jnp.sum(jnp.where(r == c, S, 0.0), axis=0, keepdims=True)  # (1, T)
    neg_n2 = jnp.sum(g * n2_lane[:, None, :], axis=-1)               # (T, num)

    # 4) cosine-similarity logits: one EUP rsqrt, 1/temp folded into a multiply,
    #    per-norm eps clamp matching F.cosine_similarity(eps=1e-8).
    na2 = jnp.sum(feats * feats, axis=-1, keepdims=True)             # (T, 1) anchor norms^2
    pos_dots = jnp.sum(feats * ctx, axis=-1, keepdims=True)          # (T, 1)
    pos_n2 = jnp.sum(ctx * ctx, axis=-1, keepdims=True)              # (T, 1)
    dots = jnp.concatenate([pos_dots, neg_dots], axis=-1)            # (T, P)
    nt2 = jnp.concatenate([pos_n2, neg_n2], axis=-1)                 # (T, P)
    eps2 = 1e-16                                                     # == (1e-8)^2, clamp each norm
    inv = jax.lax.rsqrt(jnp.maximum(na2, eps2) * jnp.maximum(nt2, eps2))
    logits = dots * inv * inv_temp
    # TODO(synk): index-based false-negative mask (negative index == anchor position),
    # precomputed host-side; replaces the original's exact-float-equality test and
    # buggy `logits[1:][...]` indexing, which never fire in practice.
    logits = jnp.where(fneg_ref[0] > 0.5, -jnp.inf, logits)          # (T, P)

    # 5) one lane-dense (T, 128) store: [ features | logits | zero pad ].
    pad = jnp.zeros((Tt, lane - Dd - P), jnp.float32)
    out_ref[0] = jnp.concatenate([feats, logits, pad], axis=-1)


# ---------------------------------------------------------------------------
# Host-side glue reproducing the module's python/random logic.
# ---------------------------------------------------------------------------
def apply_mask(batch_size, seq_len, mask_rate, mask_span, rng):
    """Faithful numpy port of Wav2Vec2._apply_mask (host-side, random)."""
    mask = np.zeros((batch_size, seq_len), dtype=bool)
    for i in range(batch_size):
        mask_seeds = []
        mask_inds = []
        while len(mask_seeds) == 0 and mask_rate > 0:
            mask_seeds = np.nonzero(rng.random(seq_len) < mask_rate)[0]
            for seed in mask_seeds:
                for j in range(seed, seed + mask_span):
                    if j >= seq_len:
                        break
                    elif j not in mask_inds:
                        mask_inds.append(j)
        mask[i, mask_inds] = True
    return jnp.asarray(mask)


def init_params(key):
    ks = jax.random.split(key, 6)
    scale = 0.1
    return {
        "conv_w": scale * jax.random.normal(ks[0], (D, C_IN, K), jnp.float32),
        "conv_b": scale * jax.random.normal(ks[1], (D,), jnp.float32),
        "tr_w": scale * jax.random.normal(ks[2], (D, D), jnp.float32),
        "tr_b": scale * jax.random.normal(ks[3], (D,), jnp.float32),
        "mask_emb": scale * jax.random.normal(ks[4], (D,), jnp.float32),
        # CLS token of the transformer stand-in; its output column is dropped by
        # context_features[..., 1:] so it never reaches any returned tensor.
        "cls_tok": scale * jax.random.normal(ks[5], (D,), jnp.float32),
    }


def wav2vec2_forward(inputs, params, mask, neg_key):
    """Matches Wav2Vec2.forward: returns (logits, features, mask).

    features are returned feature-last, shape (B, T, D) (same tensor as the
    PyTorch (B, D, T) NCL layout, just lane-dense)."""
    Bb, Cin, Ll = inputs.shape
    Tt = Ll // K
    CK = Cin * K
    P = NUM_NEG + 1
    assert D + P <= LANE

    # --- feature-last layouts end-to-end (lane axis == feature dim) ---------
    patches = inputs.reshape(Bb, Cin, Tt, K).transpose(0, 2, 1, 3)
    patches = patches.reshape(Bb, Tt, CK).astype(jnp.bfloat16)        # (B, T, Cin*K)
    wc = params["conv_w"].reshape(D, CK).T.astype(jnp.bfloat16)       # (Cin*K, D)
    bc = params["conv_b"].reshape(1, D)
    wt = params["tr_w"].T.astype(jnp.bfloat16)                        # (D, D): y = x @ W^T + b
    bt = params["tr_b"].reshape(1, D)
    memb = params["mask_emb"].reshape(1, D)
    mask_f = mask.astype(jnp.float32).reshape(Bb, Tt, 1)

    # --- negatives (host-side randomness, like the original) ---------------
    # torch.randint(0, T-1) and jax.random.randint(..., 0, T-1) both sample [0, T-2].
    neg_local = jax.random.randint(neg_key, (Bb, Tt * NUM_NEG), 0, Tt - 1)
    neg_local3 = neg_local.reshape(Bb, Tt, NUM_NEG)
    g3 = jax.nn.one_hot(neg_local3, Tt, dtype=jnp.float32)            # (B, T, num, T)
    fneg = (neg_local3 == jnp.arange(Tt, dtype=neg_local.dtype)[None, :, None])
    fneg = jnp.concatenate(
        [jnp.zeros((Bb, Tt, 1), jnp.float32), fneg.astype(jnp.float32)], axis=-1)  # (B, T, P)

    # --- single fused Pallas call -------------------------------------------
    out = pl.pallas_call(
        functools.partial(_fused_kernel, inv_temp=1.0 / TEMP),
        grid=(Bb,),
        in_specs=[
            pl.BlockSpec((1, Tt, CK), lambda b: (b, 0, 0)),            # patches (bf16)
            pl.BlockSpec((CK, D), lambda b: (0, 0)),                   # conv weight (bf16)
            pl.BlockSpec((1, D), lambda b: (0, 0)),                    # conv bias
            pl.BlockSpec((1, Tt, 1), lambda b: (b, 0, 0)),             # time mask (0/1)
            pl.BlockSpec((1, D), lambda b: (0, 0)),                    # mask embedding
            pl.BlockSpec((D, D), lambda b: (0, 0)),                    # transformer W^T (bf16)
            pl.BlockSpec((1, D), lambda b: (0, 0)),                    # transformer bias
            pl.BlockSpec((1, Tt, NUM_NEG, Tt), lambda b: (b, 0, 0, 0)),  # negative one-hot
            pl.BlockSpec((1, Tt, P), lambda b: (b, 0, 0)),             # false-negative mask
        ],
        out_specs=pl.BlockSpec((1, Tt, LANE), lambda b: (b, 0, 0)),
        out_shape=jax.ShapeDtypeStruct((Bb, Tt, LANE), jnp.float32),
        compiler_params=pltpu.CompilerParams(
            # batch blocks shard across v7x's two TensorCores; VMEM use is tiny,
            # so no vmem_limit_bytes needed (re-derive tiling if scaled to real
            # wav2vec2 dims, especially for v7x's 64 MiB VMEM).
            dimension_semantics=("parallel",),
        ),
    )(patches, wc, bc, mask_f, memb, wt, bt, g3, fneg)

    features = out[:, :, :D]                                          # (B, T, D)
    logits = out[:, :, D:D + P].reshape(Bb * Tt, P)                   # (B*T, P)
    return logits, features, mask


if __name__ == "__main__":
    key = jax.random.PRNGKey(0)
    k_in, k_par, k_neg = jax.random.split(key, 3)

    inputs = jax.random.normal(k_in, (B, C_IN, L), jnp.float32)       # raw "wav", NCL
    params = init_params(k_par)
    mask = apply_mask(B, T, MASK_RATE, MASK_SPAN, np.random.default_rng(0))

    fwd = jax.jit(wav2vec2_forward)
    logits, features, mask_out = fwd(inputs, params, mask, k_neg)
    jax.block_until_ready((logits, features, mask_out))

    assert logits.shape == (B * T, NUM_NEG + 1)
    assert features.shape == (B, T, D)
    assert mask_out.shape == (B, T)
    assert bool(jnp.isfinite(features).all())
    assert bool(jnp.isfinite(logits[:, 0]).all())   # positives are never masked
    print("KERNEL_OK")
</pallas_src>

<mosaic_0001>
module attributes {stable_mosaic.version = 11 : i64} {
  func.func @_fused_kernel(%arg0: i32, %arg1: memref<1x8x8xbf16, #tpu.memory_space<vmem>>, %arg2: memref<8x32xbf16, #tpu.memory_space<vmem>>, %arg3: memref<1x32xf32, #tpu.memory_space<vmem>>, %arg4: memref<1x8x1xf32, #tpu.memory_space<vmem>>, %arg5: memref<1x32xf32, #tpu.memory_space<vmem>>, %arg6: memref<32x32xbf16, #tpu.memory_space<vmem>>, %arg7: memref<1x32xf32, #tpu.memory_space<vmem>>, %arg8: memref<1x8x20x8xf32, #tpu.memory_space<vmem>>, %arg9: memref<1x8x21xf32, #tpu.memory_space<vmem>>, %arg10: memref<1x8x128xf32, #tpu.memory_space<vmem>>) attributes {dimension_semantics = [#tpu.dimension_semantics<parallel>], iteration_bounds = array<i64: 2>, scalar_prefetch = 0 : i64, scratch_operands = 0 : i64, tpu.core_type = #tpu.core_type<tc>, window_params = [{transform_indices = @transform_0, window_bounds = array<i64: 1, 8, 8>}, {pipeline_mode = #tpu.pipeline_mode<synchronous>, transform_indices = @transform_1, window_bounds = array<i64: 8, 32>}, {pipeline_mode = #tpu.pipeline_mode<synchronous>, transform_indices = @transform_2, window_bounds = array<i64: 1, 32>}, {transform_indices = @transform_3, window_bounds = array<i64: 1, 8, 1>}, {pipeline_mode = #tpu.pipeline_mode<synchronous>, transform_indices = @transform_4, window_bounds = array<i64: 1, 32>}, {pipeline_mode = #tpu.pipeline_mode<synchronous>, transform_indices = @transform_5, window_bounds = array<i64: 32, 32>}, {pipeline_mode = #tpu.pipeline_mode<synchronous>, transform_indices = @transform_6, window_bounds = array<i64: 1, 32>}, {transform_indices = @transform_7, window_bounds = array<i64: 1, 8, 20, 8>}, {transform_indices = @transform_8, window_bounds = array<i64: 1, 8, 21>}, {transform_indices = @transform_9, window_bounds = array<i64: 1, 8, 128>}]} {
    %c0 = arith.constant 0 : index
    %c0_0 = arith.constant 0 : index
    %c0_1 = arith.constant 0 : index
    %0 = vector.load %arg1[%c0, %c0_0, %c0_1] : memref<1x8x8xbf16, #tpu.memory_space<vmem>>, vector<1x8x8xbf16>
    %1 = vector.shape_cast %0 : vector<1x8x8xbf16> to vector<8x8xbf16>
    %c0_2 = arith.constant 0 : index
    %c0_3 = arith.constant 0 : index
    %2 = vector.load %arg2[%c0_2, %c0_3] : memref<8x32xbf16, #tpu.memory_space<vmem>>, vector<8x32xbf16>
    %cst = arith.constant dense<0.000000e+00> : vector<8x32xf32>
    %3 = tpu.matmul %1, %2, %cst {dimension_numbers = #tpu.dot_dimension_numbers<[1], [0], [0], [1], [0, 0, 1, 1], [], []>} : vector<8x8xbf16>, vector<8x32xbf16>, vector<8x32xf32> -> vector<8x32xf32>
    %c0_4 = arith.constant 0 : index
    %c0_5 = arith.constant 0 : index
    %4 = vector.load %arg3[%c0_4, %c0_5] : memref<1x32xf32, #tpu.memory_space<vmem>>, vector<1x32xf32>
    %5 = vector.broadcast %4 : vector<1x32xf32> to vector<8x32xf32>
    %6 = arith.addf %3, %5 : vector<8x32xf32>
    %cst_6 = arith.constant 0.000000e+00 : f32
    %7 = vector.broadcast %cst_6 : f32 to vector<8x32xf32>
    %8 = arith.maximumf %6, %7 : vector<8x32xf32>
    %c0_7 = arith.constant 0 : index
    %c0_8 = arith.constant 0 : index
    %c0_9 = arith.constant 0 : index
    %9 = vector.load %arg4[%c0_7, %c0_8, %c0_9] : memref<1x8x1xf32, #tpu.memory_space<vmem>>, vector<1x8x1xf32>
    %10 = vector.shape_cast %9 : vector<1x8x1xf32> to vector<8x1xf32>
    %cst_10 = arith.constant 5.000000e-01 : f32
    %11 = vector.broadcast %cst_10 : f32 to vector<8x1xf32>
    %12 = arith.cmpf ogt, %10, %11 : vector<8x1xf32>
    %c0_11 = arith.constant 0 : index
    %c0_12 = arith.constant 0 : index
    %13 = vector.load %arg5[%c0_11, %c0_12] : memref<1x32xf32, #tpu.memory_space<vmem>>, vector<1x32xf32>
    %14 = vector.shape_cast %12 : vector<8x1xi1> to vector<8x1xi1>
    %15 = vector.broadcast %14 : vector<8x1xi1> to vector<8x32xi1>
    %16 = vector.shape_cast %13 : vector<1x32xf32> to vector<1x32xf32>
    %17 = vector.broadcast %16 : vector<1x32xf32> to vector<8x32xf32>
    %18 = arith.select %15, %17, %8 : vector<8x32xi1>, vector<8x32xf32>
    %19 = arith.truncf %18 : vector<8x32xf32> to vector<8x32xbf16>
    %c0_13 = arith.constant 0 : index
    %c0_14 = arith.constant 0 : index
    %20 = vector.load %arg6[%c0_13, %c0_14] : memref<32x32xbf16, #tpu.memory_space<vmem>>, vector<32x32xbf16>
    %cst_15 = arith.constant dense<0.000000e+00> : vector<8x32xf32>
    %21 = tpu.matmul %19, %20, %cst_15 {dimension_numbers = #tpu.dot_dimension_numbers<[1], [0], [0], [1], [0, 0, 1, 1], [], []>} : vector<8x32xbf16>, vector<32x32xbf16>, vector<8x32xf32> -> vector<8x32xf32>
    %c0_16 = arith.constant 0 : index
    %c0_17 = arith.constant 0 : index
    %22 = vector.load %arg7[%c0_16, %c0_17] : memref<1x32xf32, #tpu.memory_space<vmem>>, vector<1x32xf32>
    %23 = vector.broadcast %22 : vector<1x32xf32> to vector<8x32xf32>
    %24 = arith.addf %21, %23 : vector<8x32xf32>
    %25 = tpu.transpose %8, [1, 0] : vector<8x32xf32> -> vector<32x8xf32>
    %cst_18 = arith.constant dense<0.000000e+00> : vector<8x8xf32>
    %26 = tpu.matmul %8, %25, %cst_18 {dimension_numbers = #tpu.dot_dimension_numbers<[1], [0], [0], [1], [0, 0, 1, 1], [], []>} : vector<8x32xf32>, vector<32x8xf32>, vector<8x8xf32> -> vector<8x8xf32>
    %c0_19 = arith.constant 0 : index
    %c0_20 = arith.constant 0 : index
    %c0_21 = arith.constant 0 : index
    %c0_22 = arith.constant 0 : index
    %27 = vector.load %arg8[%c0_19, %c0_20, %c0_21, %c0_22] : memref<1x8x20x8xf32, #tpu.memory_space<vmem>>, vector<1x8x20x8xf32>
    %28 = vector.shape_cast %27 : vector<1x8x20x8xf32> to vector<8x20x8xf32>
    %29 = vector.shape_cast %26 : vector<8x8xf32> to vector<8x1x8xf32>
    %30 = vector.broadcast %29 : vector<8x1x8xf32> to vector<8x20x8xf32>
    %31 = arith.mulf %28, %30 : vector<8x20x8xf32>
    %cst_23 = arith.constant dense<0.000000e+00> : vector<8x20xf32>
    %32 = vector.multi_reduction <add>, %31, %cst_23 [2] : vector<8x20x8xf32> to vector<8x20xf32>
    %33 = tpu.iota {dimensions = array<i32: 0>} : vector<8x8xi32>
    %34 = tpu.iota {dimensions = array<i32: 1>} : vector<8x8xi32>
    %35 = arith.cmpi eq, %33, %34 : vector<8x8xi32>
    %cst_24 = arith.constant 0.000000e+00 : f32
    %36 = vector.broadcast %cst_24 : f32 to vector<8x8xf32>
    %37 = arith.select %35, %26, %36 : vector<8x8xi1>, vector<8x8xf32>
    %cst_25 = arith.constant dense<0.000000e+00> : vector<8xf32>
    %38 = vector.multi_reduction <add>, %37, %cst_25 [0] : vector<8x8xf32> to vector<8xf32>
    %39 = vector.shape_cast %38 : vector<8xf32> to vector<1x8xf32>
    %40 = vector.shape_cast %39 : vector<1x8xf32> to vector<1x1x8xf32>
    %41 = vector.broadcast %40 : vector<1x1x8xf32> to vector<8x20x8xf32>
    %42 = arith.mulf %28, %41 : vector<8x20x8xf32>
    %cst_26 = arith.constant dense<0.000000e+00> : vector<8x20xf32>
    %43 = vector.multi_reduction <add>, %42, %cst_26 [2] : vector<8x20x8xf32> to vector<8x20xf32>
    %44 = arith.mulf %8, %8 : vector<8x32xf32>
    %cst_27 = arith.constant dense<0.000000e+00> : vector<8xf32>
    %45 = vector.multi_reduction <add>, %44, %cst_27 [1] : vector<8x32xf32> to vector<8xf32>
    %46 = vector.shape_cast %45 : vector<8xf32> to vector<8x1xf32>
    %47 = arith.mulf %8, %24 : vector<8x32xf32>
    %cst_28 = arith.constant dense<0.000000e+00> : vector<8xf32>
    %48 = vector.multi_reduction <add>, %47, %cst_28 [1] : vector<8x32xf32> to vector<8xf32>
    %49 = vector.shape_cast %48 : vector<8xf32> to vector<8x1xf32>
    %50 = arith.mulf %24, %24 : vector<8x32xf32>
    %cst_29 = arith.constant dense<0.000000e+00> : vector<8xf32>
    %51 = vector.multi_reduction <add>, %50, %cst_29 [1] : vector<8x32xf32> to vector<8xf32>
    %52 = vector.shape_cast %51 : vector<8xf32> to vector<8x1xf32>
    %53 = tpu.concatenate %49, %32 in 1 : vector<8x1xf32>, vector<8x20xf32> -> vector<8x21xf32>
    %54 = tpu.concatenate %52, %43 in 1 : vector<8x1xf32>, vector<8x20xf32> -> vector<8x21xf32>
    %cst_30 = arith.constant 1.000000e-16 : f32
    %55 = vector.broadcast %cst_30 : f32 to vector<8x1xf32>
    %56 = arith.maximumf %46, %55 : vector<8x1xf32>
    %cst_31 = arith.constant 1.000000e-16 : f32
    %57 = vector.broadcast %cst_31 : f32 to vector<8x21xf32>
    %58 = arith.maximumf %54, %57 : vector<8x21xf32>
    %59 = vector.broadcast %56 : vector<8x1xf32> to vector<8x21xf32>
    %60 = arith.mulf %59, %58 : vector<8x21xf32>
    %61 = math.rsqrt %60 : vector<8x21xf32>
    %62 = arith.mulf %53, %61 : vector<8x21xf32>
    %cst_32 = arith.constant 1.000000e+01 : f32
    %63 = vector.broadcast %cst_32 : f32 to vector<8x21xf32>
    %64 = arith.mulf %62, %63 : vector<8x21xf32>
    %c0_33 = arith.constant 0 : index
    %c0_34 = arith.constant 0 : index
    %c0_35 = arith.constant 0 : index
    %65 = vector.load %arg9[%c0_33, %c0_34, %c0_35] : memref<1x8x21xf32, #tpu.memory_space<vmem>>, vector<1x8x21xf32>
    %66 = vector.shape_cast %65 : vector<1x8x21xf32> to vector<8x21xf32>
    %cst_36 = arith.constant 5.000000e-01 : f32
    %67 = vector.broadcast %cst_36 : f32 to vector<8x21xf32>
    %68 = arith.cmpf ogt, %66, %67 : vector<8x21xf32>
    %cst_37 = arith.constant 0xFF800000 : f32
    %69 = vector.broadcast %cst_37 : f32 to vector<8x21xf32>
    %70 = arith.select %68, %69, %64 : vector<8x21xi1>, vector<8x21xf32>
    %cst_38 = arith.constant 0.000000e+00 : f32
    %71 = vector.broadcast %cst_38 : f32 to vector<8x75xf32>
    %72 = tpu.concatenate %8, %70, %71 in 1 : vector<8x32xf32>, vector<8x21xf32>, vector<8x75xf32> -> vector<8x128xf32>
    %c0_39 = arith.constant 0 : index
    %c0_40 = arith.constant 0 : index
    %c0_41 = arith.constant 0 : index
    %73 = vector.load %arg10[%c0_39, %c0_40, %c0_41] : memref<1x8x128xf32, #tpu.memory_space<vmem>>, vector<1x8x128xf32>
    %74 = vector.shape_cast %73 : vector<1x8x128xf32> to vector<8x128xf32>
    %75 = vector.shape_cast %72 : vector<8x128xf32> to vector<1x8x128xf32>
    tpu.vector_store %arg10[%c0_39, %c0_40, %c0_41], %75 {strides = array<i32>} : memref<1x8x128xf32, #tpu.memory_space<vmem>>, vector<1x8x128xf32>,
    return
  }
  func.func @transform_0(%arg0: i32) -> (i32, i32, i32) {
    %c0_i32 = arith.constant 0 : i32
    %c0_i32_0 = arith.constant 0 : i32
    %c0_i32_1 = arith.constant 0 : i32
    return %arg0, %c0_i32, %c0_i32_0 : i32, i32, i32
  }
  func.func @transform_1(%arg0: i32) -> (i32, i32) {
    %c0_i32 = arith.constant 0 : i32
    %c0_i32_0 = arith.constant 0 : i32
    %c0_i32_1 = arith.constant 0 : i32
    return %c0_i32, %c0_i32_0 : i32, i32
  }
  func.func @transform_2(%arg0: i32) -> (i32, i32) {
    %c0_i32 = arith.constant 0 : i32
    %c0_i32_0 = arith.constant 0 : i32
    %c0_i32_1 = arith.constant 0 : i32
    return %c0_i32, %c0_i32_0 : i32, i32
  }
  func.func @transform_3(%arg0: i32) -> (i32, i32, i32) {
    %c0_i32 = arith.constant 0 : i32
    %c0_i32_0 = arith.constant 0 : i32
    %c0_i32_1 = arith.constant 0 : i32
    return %arg0, %c0_i32, %c0_i32_0 : i32, i32, i32
  }
  func.func @transform_4(%arg0: i32) -> (i32, i32) {
    %c0_i32 = arith.constant 0 : i32
    %c0_i32_0 = arith.constant 0 : i32
    %c0_i32_1 = arith.constant 0 : i32
    return %c0_i32, %c0_i32_0 : i32, i32
  }
  func.func @transform_5(%arg0: i32) -> (i32, i32) {
    %c0_i32 = arith.constant 0 : i32
    %c0_i32_0 = arith.constant 0 : i32
    %c0_i32_1 = arith.constant 0 : i32
    return %c0_i32, %c0_i32_0 : i32, i32
  }
  func.func @transform_6(%arg0: i32) -> (i32, i32) {
    %c0_i32 = arith.constant 0 : i32
    %c0_i32_0 = arith.constant 0 : i32
    %c0_i32_1 = arith.constant 0 : i32
    return %c0_i32, %c0_i32_0 : i32, i32
  }
  func.func @transform_7(%arg0: i32) -> (i32, i32, i32, i32) {
    %c0_i32 = arith.constant 0 : i32
    %c0_i32_0 = arith.constant 0 : i32
    %c0_i32_1 = arith.constant 0 : i32
    %c0_i32_2 = arith.constant 0 : i32
    return %arg0, %c0_i32, %c0_i32_0, %c0_i32_1 : i32, i32, i32, i32
  }
  func.func @transform_8(%arg0: i32) -> (i32, i32, i32) {
    %c0_i32 = arith.constant 0 : i32
    %c0_i32_0 = arith.constant 0 : i32
    %c0_i32_1 = arith.constant 0 : i32
    return %arg0, %c0_i32, %c0_i32_0 : i32, i32, i32
  }
  func.func @transform_9(%arg0: i32) -> (i32, i32, i32) {
    %c0_i32 = arith.constant 0 : i32
    %c0_i32_0 = arith.constant 0 : i32
    %c0_i32_1 = arith.constant 0 : i32
    return %arg0, %c0_i32, %c0_i32_0 : i32, i32, i32
  }
}

</mosaic_0001>

<llo_original>
// kernel: eq.1
$region0: #{eq.1}
  %s0 = inlined_call_operand.vmem [shape: s32[2,160], index: 0, kind: input, shape index: {}]
  %s1 = inlined_call_operand.vmem [shape: s32[2,8,20], index: 1, kind: output, shape index: {}]
  $region1: #{eq.1} parent=0
    #allocation0 [shape = 'u8[8192]{0}', space=vmem, size = 0x2000, scoped, tag = 'scoped mem for input reshape']
    %s3 = sshllo.u32 0, 2
    %s4 = scalar_lea.vmem %s0, 2
    %v5 = vld [vmem:[%s4] sm:%s3]
    %s6 = scalar_lea.vmem [#allocation0], 8
    %7 = vst [vmem:[%s6] sm:%s3] %v5
    %v8 = vld [vmem:[%s0] sm:%s3]
    %9 = vst [vmem:[#allocation0] sm:%s3] %v8
    %v10 = vld [vmem:[#allocation0] sm:$0x3]
    %vm11 = vcmask 162816
    %12 = vst.msk [vmem:[%s1] ss:$8 sm:$0x3] %vm11, %v10
    %s13 = scalar_lea.vmem [#allocation0], 8
    %v14 = vld [vmem:[%s13] sm:$0x3]
    %15 = vrot.lane.b32.xlu0 %v14, 116
    %v16 = vpop.permute.xlu0 %15
    %vm17 = vcmask 162816
    %s18 = scalar_lea.vmem %s1, 7
    %19 = vst.msk [vmem:[%s18] ss:$8 sm:$0x3] %vm17, %v16
    %v20 = vld [vmem:[#allocation0] sm:$0x3]
    %21 = vrot.lane.b32.xlu0 %v20, 108
    %v22 = vpop.permute.xlu0 %21
    %vm23 = vcmask 162816
    %s24 = scalar_lea.vmem %s1, 1
    %25 = vst.msk [vmem:[%s24] ss:$8 sm:$0x3] %vm23, %v22
    %v26 = vld [vmem:[#allocation0] sm:$0x3]
    %27 = vrot.lane.b32.xlu0 %v26, 88
    %v28 = vpop.permute.xlu0 %27
    %vm29 = vcmask 162816
    %s30 = scalar_lea.vmem %s1, 2
    %31 = vst.msk [vmem:[%s30] ss:$8 sm:$0x3] %vm29, %v28
    %v32 = vld [vmem:[#allocation0] sm:$0x3]
    %33 = vrot.lane.b32.xlu0 %v32, 68
    %v34 = vpop.permute.xlu0 %33
    %vm35 = vcmask 162816
    %s36 = scalar_lea.vmem %s1, 3
    %37 = vst.msk [vmem:[%s36] ss:$8 sm:$0x3] %vm35, %v34
    %v38 = vld [vmem:[#allocation0] sm:$0x3]
    %39 = vrot.lane.b32.xlu0 %v38, 48
    %v40 = vpop.permute.xlu0 %39
    %vm41 = vcmask 162816
    %s42 = scalar_lea.vmem %s1, 4
    %43 = vst.msk [vmem:[%s42] ss:$8 sm:$0x3] %vm41, %v40
    %v44 = vld [vmem:[#allocation0] sm:$0x3]
    %45 = vrot.lane.b32.xlu0 %v44, 28
    %v46 = vpop.permute.xlu0 %45
    %vm47 = vcmask 162816
    %s48 = scalar_lea.vmem %s1, 5
    %49 = vst.msk [vmem:[%s48] ss:$8 sm:$0x3] %vm47, %v46
    %v50 = vld [vmem:[#allocation0] sm:$0x3]
    %s51 = scalar_lea.vmem [#allocation0], 8
    %v52 = vld [vmem:[%s51] sm:$0x3]
    %vm53 = vcmask 982016
    %v54 = vsel %vm53, %v52, %v50
    %55 = vrot.lane.b32.xlu0 %v54, 8
    %v56 = vpop.permute.xlu0 %55
    %vm57 = vcmask 64512
    %s58 = scalar_lea.vmem %s1, 6
    %59 = vst.msk [vmem:[%s58] ss:$8 sm:$0x3] %vm57, %v56
    %vm60 = vcmask 162880
    %s61 = scalar_lea.vmem %s1, 6
    %62 = vst.msk [vmem:[%s61] ss:$8 sm:$0x3] %vm60, %v56

// kernel: wav2vec2_forward.1
$region0: #{wav2vec2_forward.1}
  #allocation0 [shape = 'u32[]', space=smem, size = 0x4, offset = 0x4, fixed_abs, tag = 'smem constant byte address 0x4 - core index']
  #allocation1 [shape = 'u32[144,128]{1,0:T(1,128)}', space=vmem, size = 0x12000, scoped, tag = 'internal scratch']
  %s0 = inlined_call_operand.vmem [shape: bf16[2,8,8], index: 0, kind: input, shape index: {}]
  %s1 = inlined_call_operand.vmem [shape: bf16[8,32], index: 1, kind: input, shape index: {}]
  %s2 = inlined_call_operand.vmem [shape: f32[1,32], index: 2, kind: input, shape index: {}]
  %s3 = inlined_call_operand.vmem [shape: f32[2,8,1], index: 3, kind: input, shape index: {}]
  %s4 = inlined_call_operand.vmem [shape: f32[1,32], index: 4, kind: input, shape index: {}]
  %s5 = inlined_call_operand.vmem [shape: bf16[32,32], index: 5, kind: input, shape index: {}]
  %s6 = inlined_call_operand.vmem [shape: f32[1,32], index: 6, kind: input, shape index: {}]
  %s7 = inlined_call_operand.vmem [shape: f32[2,8,20,8], index: 7, kind: input, shape index: {}]
  %s8 = inlined_call_operand.vmem [shape: f32[2,8,21], index: 8, kind: input, shape index: {}]
  %s9 = inlined_call_operand.vmem [shape: f32[2,8,128], index: 9, kind: output, shape index: {}]
  %s10 = sld [smem:[#allocation0]]
  $region69: #{wav2vec2_forward.1} parent=0
    _
  %s12 = ssub.s32 1, %s10
  %s13 = scalar_select 0, %s12, %s10
  loop: start=0, step=1, limit=4
  $region2: #{wav2vec2_forward.1} parent=0 // loop_pre_header
    _
  $region3: #{wav2vec2_forward.1} parent=0 // loop_header
    %s15 = sphi 0, %s19
    %p16 = scmp.ge.s32.totalorder %s15, 4
    %s25 = sphi 0, %s27
    %s28 = sphi 0, %s25
    %s29 = sphi 0, %s28
    %s45 = sphi 0, %s29
    %s49 = sphi 0, %s49
    %s51 = sphi 0, %s49
    %s52 = sphi 0, %s51
    %s66 = sphi 0, %s52
    %s70 = sphi 0, %s70
    %s72 = sphi 0, %s70
    %s73 = sphi 0, %s72
    %s87 = sphi 0, %s73
    %s93 = sphi 0, %s95
    %s96 = sphi 0, %s93
    %s97 = sphi 0, %s96
    %s113 = sphi 0, %s97
    %s117 = sphi 0, %s117
    %s119 = sphi 0, %s117
    %s120 = sphi 0, %s119
    %s134 = sphi 0, %s120
    %s138 = sphi 0, %s138
    %s140 = sphi 0, %s138
    %s141 = sphi 0, %s140
    %s155 = sphi 0, %s141
    %s159 = sphi 0, %s159
    %s161 = sphi 0, %s159
    %s162 = sphi 0, %s161
    %s176 = sphi 0, %s162
    %s182 = sphi 0, %s184
    %s185 = sphi 0, %s182
    %s186 = sphi 0, %s185
    %s202 = sphi 0, %s186
    %s208 = sphi 0, %s210
    %s211 = sphi 0, %s208
    %s212 = sphi 0, %s211
    %s228 = sphi 0, %s212
    %s234 = sphi 0, %s236
    %s237 = sphi 0, %s234
    %s238 = sphi 0, %s237
    %s254 = sphi 0, %s238
  $region4: #{wav2vec2_forward.1} parent=0 // loop_header_branch
    %18 = sbr.rel (%p16) target = $region8
  $region5: #{wav2vec2_forward.1} parent=0 // loop_body
    %s20 = ssub.s32 %s15, 1
    %s21 = ssub.s32 %s15, 2
    %s22 = sadd.s32 %s15, 1
    %s23 = ssub.s32 %s15, %s22
    %p24 = scmp.eq.s32.totalorder %s23, 0
    %s26 = sadd.s32 %s25, 1
    %s27 = scalar_select %p24, %s25, %s26
    %p30 = pneg %p24
    %p31 = scmp.eq.s32.totalorder %s15, 1
    %p32 = por %p30, %p31
    %p33 = scmp.ne.s32.totalorder %s25, %s28
    %p34 = scmp.eq.s32.totalorder %s15, 0
    %p35 = por %p33, %p34
    %p36 = scmp.ne.s32.totalorder %s25, %s28
    %p37 = scmp.eq.s32.totalorder %s20, 1
    %p38 = por %p36, %p37
    %p39 = scmp.ne.s32.totalorder %s28, %s29
    %p40 = scmp.eq.s32.totalorder %s20, 0
    %p41 = por %p39, %p40
    %p42 = scmp.ne.s32.totalorder %s28, %s29
    %p43 = scmp.eq.s32.totalorder %s21, 1
    %p44 = por %p42, %p43
    %p46 = scmp.ne.s32.totalorder %s29, %s45
    %p47 = scmp.eq.s32.totalorder %s21, 0
    %p48 = por %p46, %p47
    %s50 = sadd.s32 %s49, 1
    %p53 = scmp.eq.s32.totalorder %s15, 1
    %p54 = scmp.ne.s32.totalorder %s49, %s51
    %p55 = scmp.eq.s32.totalorder %s15, 0
    %p56 = por %p54, %p55
    %p57 = scmp.ne.s32.totalorder %s49, %s51
    %p58 = scmp.eq.s32.totalorder %s20, 1
    %p59 = por %p57, %p58
    %p60 = scmp.ne.s32.totalorder %s51, %s52
    %p61 = scmp.eq.s32.totalorder %s20, 0
    %p62 = por %p60, %p61
    %p63 = scmp.ne.s32.totalorder %s51, %s52
    %p64 = scmp.eq.s32.totalorder %s21, 1
    %p65 = por %p63, %p64
    %p67 = scmp.ne.s32.totalorder %s52, %s66
    %p68 = scmp.eq.s32.totalorder %s21, 0
    %p69 = por %p67, %p68
    %s71 = sadd.s32 %s70, 1
    %p74 = scmp.eq.s32.totalorder %s15, 1
    %p75 = scmp.ne.s32.totalorder %s70, %s72
    %p76 = scmp.eq.s32.totalorder %s15, 0
    %p77 = por %p75, %p76
    %p78 = scmp.ne.s32.totalorder %s70, %s72
    %p79 = scmp.eq.s32.totalorder %s20, 1
    %p80 = por %p78, %p79
    %p81 = scmp.ne.s32.totalorder %s72, %s73
    %p82 = scmp.eq.s32.totalorder %s20, 0
    %p83 = por %p81, %p82
    %p84 = scmp.ne.s32.totalorder %s72, %s73
    %p85 = scmp.eq.s32.totalorder %s21, 1
    %p86 = por %p84, %p85
    %p88 = scmp.ne.s32.totalorder %s73, %s87
    %p89 = scmp.eq.s32.totalorder %s21, 0
    %p90 = por %p88, %p89
    %s91 = ssub.s32 %s15, %s22
    %p92 = scmp.eq.s32.totalorder %s91, 0
    %s94 = sadd.s32 %s93, 1
    %s95 = scalar_select %p92, %s93, %s94
    %p98 = pneg %p92
    %p99 = scmp.eq.s32.totalorder %s15, 1
    %p100 = por %p98, %p99
    %p101 = scmp.ne.s32.totalorder %s93, %s96
    %p102 = scmp.eq.s32.totalorder %s15, 0
    %p103 = por %p101, %p102
    %p104 = scmp.ne.s32.totalorder %s93, %s96
    %p105 = scmp.eq.s32.totalorder %s20, 1
    %p106 = por %p104, %p105
    %p107 = scmp.ne.s32.totalorder %s96, %s97
    %p108 = scmp.eq.s32.totalorder %s20, 0
    %p109 = por %p107, %p108
    %p110 = scmp.ne.s32.totalorder %s96, %s97
    %p111 = scmp.eq.s32.totalorder %s21, 1
    %p112 = por %p110, %p111
    %p114 = scmp.ne.s32.totalorder %s97, %s113
    %p115 = scmp.eq.s32.totalorder %s21, 0
    %p116 = por %p114, %p115
    %s118 = sadd.s32 %s117, 1
    %p121 = scmp.eq.s32.totalorder %s15, 1
    %p122 = scmp.ne.s32.totalorder %s117, %s119
    %p123 = scmp.eq.s32.totalorder %s15, 0
    %p124 = por %p122, %p123
    %p125 = scmp.ne.s32.totalorder %s117, %s119
    %p126 = scmp.eq.s32.totalorder %s20, 1
    %p127 = por %p125, %p126
    %p128 = scmp.ne.s32.totalorder %s119, %s120
    %p129 = scmp.eq.s32.totalorder %s20, 0
    %p130 = por %p128, %p129
    %p131 = scmp.ne.s32.totalorder %s119, %s120
    %p132 = scmp.eq.s32.totalorder %s21, 1
    %p133 = por %p131, %p132
    %p135 = scmp.ne.s32.totalorder %s120, %s134
    %p136 = scmp.eq.s32.totalorder %s21, 0
    %p137 = por %p135, %p136
    %s139 = sadd.s32 %s138, 1
    %p142 = scmp.eq.s32.totalorder %s15, 1
    %p143 = scmp.ne.s32.totalorder %s138, %s140
    %p144 = scmp.eq.s32.totalorder %s15, 0
    %p145 = por %p143, %p144
    %p146 = scmp.ne.s32.totalorder %s138, %s140
    %p147 = scmp.eq.s32.totalorder %s20, 1
    %p148 = por %p146, %p147
    %p149 = scmp.ne.s32.totalorder %s140, %s141
    %p150 = scmp.eq.s32.totalorder %s20, 0
    %p151 = por %p149, %p150
    %p152 = scmp.ne.s32.totalorder %s140, %s141
    %p153 = scmp.eq.s32.totalorder %s21, 1
    %p154 = por %p152, %p153
    %p156 = scmp.ne.s32.totalorder %s141, %s155
    %p157 = scmp.eq.s32.totalorder %s21, 0
    %p158 = por %p156, %p157
    %s160 = sadd.s32 %s159, 1
    %p163 = scmp.eq.s32.totalorder %s15, 1
    %p164 = scmp.ne.s32.totalorder %s159, %s161
    %p165 = scmp.eq.s32.totalorder %s15, 0
    %p166 = por %p164, %p165
    %p167 = scmp.ne.s32.totalorder %s159, %s161
    %p168 = scmp.eq.s32.totalorder %s20, 1
    %p169 = por %p167, %p168
    %p170 = scmp.ne.s32.totalorder %s161, %s162
    %p171 = scmp.eq.s32.totalorder %s20, 0
    %p172 = por %p170, %p171
    %p173 = scmp.ne.s32.totalorder %s161, %s162
    %p174 = scmp.eq.s32.totalorder %s21, 1
    %p175 = por %p173, %p174
    %p177 = scmp.ne.s32.totalorder %s162, %s176
    %p178 = scmp.eq.s32.totalorder %s21, 0
    %p179 = por %p177, %p178
    %s180 = ssub.s32 %s15, %s22
    %p181 = scmp.eq.s32.totalorder %s180, 0
    %s183 = sadd.s32 %s182, 1
    %s184 = scalar_select %p181, %s182, %s183
    %p187 = pneg %p181
    %p188 = scmp.eq.s32.totalorder %s15, 1
    %p189 = por %p187, %p188
    %p190 = scmp.ne.s32.totalorder %s182, %s185
    %p191 = scmp.eq.s32.totalorder %s15, 0
    %p192 = por %p190, %p191
    %p193 = scmp.ne.s32.totalorder %s182, %s185
    %p194 = scmp.eq.s32.totalorder %s20, 1
    %p195 = por %p193, %p194
    %p196 = scmp.ne.s32.totalorder %s185, %s186
    %p197 = scmp.eq.s32.totalorder %s20, 0
    %p198 = por %p196, %p197
    %p199 = scmp.ne.s32.totalorder %s185, %s186
    %p200 = scmp.eq.s32.totalorder %s21, 1
    %p201 = por %p199, %p200
    %p203 = scmp.ne.s32.totalorder %s186, %s202
    %p204 = scmp.eq.s32.totalorder %s21, 0
    %p205 = por %p203, %p204
    %s206 = ssub.s32 %s15, %s22
    %p207 = scmp.eq.s32.totalorder %s206, 0
    %s209 = sadd.s32 %s208, 1
    %s210 = scalar_select %p207, %s208, %s209
    %p213 = pneg %p207
    %p214 = scmp.eq.s32.totalorder %s15, 1
    %p215 = por %p213, %p214
    %p216 = scmp.ne.s32.totalorder %s208, %s211
    %p217 = scmp.eq.s32.totalorder %s15, 0
    %p218 = por %p216, %p217
    %p219 = scmp.ne.s32.totalorder %s208, %s211
    %p220 = scmp.eq.s32.totalorder %s20, 1
    %p221 = por %p219, %p220
    %p222 = scmp.ne.s32.totalorder %s211, %s212
    %p223 = scmp.eq.s32.totalorder %s20, 0
    %p224 = por %p222, %p223
    %p225 = scmp.ne.s32.totalorder %s211, %s212
    %p226 = scmp.eq.s32.totalorder %s21, 1
    %p227 = por %p225, %p226
    %p229 = scmp.ne.s32.totalorder %s212, %s228
    %p230 = scmp.eq.s32.totalorder %s21, 0
    %p231 = por %p229, %p230
    %s232 = ssub.s32 %s15, %s22
    %p233 = scmp.eq.s32.totalorder %s232, 0
    %s235 = sadd.s32 %s234, 1
    %s236 = scalar_select %p233, %s234, %s235
    %p239 = pneg %p233
    %p240 = scmp.eq.s32.totalorder %s15, 1
    %p241 = por %p239, %p240
    %p242 = scmp.ne.s32.totalorder %s234, %s237
    %p243 = scmp.eq.s32.totalorder %s15, 0
    %p244 = por %p242, %p243
    %p245 = scmp.ne.s32.totalorder %s234, %s237
    %p246 = scmp.eq.s32.totalorder %s20, 1
    %p247 = por %p245, %p246
    %p248 = scmp.ne.s32.totalorder %s237, %s238
    %p249 = scmp.eq.s32.totalorder %s20, 0
    %p250 = por %p248, %p249
    %p251 = scmp.ne.s32.totalorder %s237, %s238
    %p252 = scmp.eq.s32.totalorder %s21, 1
    %p253 = por %p251, %p252
    %p255 = scmp.ne.s32.totalorder %s238, %s254
    %p256 = scmp.eq.s32.totalorder %s21, 0
    %p257 = por %p255, %p256
    %p258 = scmp.le.s32.totalorder 1, %s15
    %p259 = scmp.lt.s32.totalorder %s15, 3
    %p260 = pnand %p258, %p259
    %p261 = pneg %p260
    // Predicated region
    $region9: #{wav2vec2_forward.1} parent=5 // pred_check
      _
    $region10: #{wav2vec2_forward.1} parent=5 // pred_check_branch
      %263 = sbr.rel (%p260) target = $region12
    $region11: #{wav2vec2_forward.1} parent=5 // pred_region
      %s264 = ssub.s32 %s15, 1
      // Predicated region
      $region13: #{wav2vec2_forward.1} parent=11 // pred_check
        %p265 = pneg %p62
      $region14: #{wav2vec2_forward.1} parent=11 // pred_check_branch
        %267 = sbr.rel (%p265) target = $region16
      $region15: #{wav2vec2_forward.1} parent=11 // pred_region
        _
      $region16: #{wav2vec2_forward.1} parent=11 // pred_fallthru
        _
      // Predicated region
      $region17: #{wav2vec2_forward.1} parent=11 // pred_check
        %p268 = pneg %p83
      $region18: #{wav2vec2_forward.1} parent=11 // pred_check_branch
        %270 = sbr.rel (%p268) target = $region20
      $region19: #{wav2vec2_forward.1} parent=11 // pred_region
        _
      $region20: #{wav2vec2_forward.1} parent=11 // pred_fallthru
        _
      // Predicated region
      $region21: #{wav2vec2_forward.1} parent=11 // pred_check
        %p271 = pneg %p130
      $region22: #{wav2vec2_forward.1} parent=11 // pred_check_branch
        %273 = sbr.rel (%p271) target = $region24
      $region23: #{wav2vec2_forward.1} parent=11 // pred_region
        _
      $region24: #{wav2vec2_forward.1} parent=11 // pred_fallthru
        _
      // Predicated region
      $region25: #{wav2vec2_forward.1} parent=11 // pred_check
        %p274 = pneg %p151
      $region26: #{wav2vec2_forward.1} parent=11 // pred_check_branch
        %276 = sbr.rel (%p274) target = $region28
      $region27: #{wav2vec2_forward.1} parent=11 // pred_region
        _
      $region28: #{wav2vec2_forward.1} parent=11 // pred_fallthru
        _
      // Predicated region
      $region29: #{wav2vec2_forward.1} parent=11 // pred_check
        %p277 = pneg %p172
      $region30: #{wav2vec2_forward.1} parent=11 // pred_check_branch
        %279 = sbr.rel (%p277) target = $region32
      $region31: #{wav2vec2_forward.1} parent=11 // pred_region
        _
      $region32: #{wav2vec2_forward.1} parent=11 // pred_fallthru
        _
    $region12: #{wav2vec2_forward.1} parent=5 // pred_fallthru
      _
    %p280 = scmp.lt.s32.totalorder %s15, 2
    // Predicated region
    $region33: #{wav2vec2_forward.1} parent=5 // pred_check
      %p281 = pneg %p280
    $region34: #{wav2vec2_forward.1} parent=5 // pred_check_branch
      %283 = sbr.rel (%p281) target = $region36
    $region35: #{wav2vec2_forward.1} parent=5 // pred_region
      // Predicated region
      $region37: #{wav2vec2_forward.1} parent=35 // pred_check
        %p284 = pneg %p35
      $region38: #{wav2vec2_forward.1} parent=35 // pred_check_branch
        %286 = sbr.rel (%p284) target = $region40
      $region39: #{wav2vec2_forward.1} parent=35 // pred_region
        %p287 = scmp.lt.s32.totalorder %s15, 1
        %s288 = scalar_select %p287, %s15, 1
        %s289 = smul.addr %s288, 4
        %s290 = scalar_lea.vmem %s0, %s289
      $region40: #{wav2vec2_forward.1} parent=35 // pred_fallthru
        _
      // Predicated region
      $region41: #{wav2vec2_forward.1} parent=35 // pred_check
        %p291 = pneg %p103
      $region42: #{wav2vec2_forward.1} parent=35 // pred_check_branch
        %293 = sbr.rel (%p291) target = $region44
      $region43: #{wav2vec2_forward.1} parent=35 // pred_region
        %p294 = scmp.lt.s32.totalorder %s15, 1
        %s295 = scalar_select %p294, %s15, 1
        %s296 = smul.addr %s295, 8
        %s297 = scalar_lea.vmem %s3, %s296
      $region44: #{wav2vec2_forward.1} parent=35 // pred_fallthru
        _
      // Predicated region
      $region45: #{wav2vec2_forward.1} parent=35 // pred_check
        %p298 = pneg %p192
      $region46: #{wav2vec2_forward.1} parent=35 // pred_check_branch
        %300 = sbr.rel (%p298) target = $region48
      $region47: #{wav2vec2_forward.1} parent=35 // pred_region
        %p301 = scmp.lt.s32.totalorder %s15, 1
        %s302 = scalar_select %p301, %s15, 1
        %s303 = smul.addr %s302, 24
        %s304 = smul.addr %s303, 8
        %s305 = scalar_lea.vmem %s7, %s304
      $region48: #{wav2vec2_forward.1} parent=35 // pred_fallthru
        _
      // Predicated region
      $region49: #{wav2vec2_forward.1} parent=35 // pred_check
        %p306 = pneg %p218
      $region50: #{wav2vec2_forward.1} parent=35 // pred_check_branch
        %308 = sbr.rel (%p306) target = $region52
      $region51: #{wav2vec2_forward.1} parent=35 // pred_region
        %p309 = scmp.lt.s32.totalorder %s15, 1
        %s310 = scalar_select %p309, %s15, 1
        %s311 = smul.addr %s310, 8
        %s312 = scalar_lea.vmem %s8, %s311
      $region52: #{wav2vec2_forward.1} parent=35 // pred_fallthru
        _
    $region36: #{wav2vec2_forward.1} parent=5 // pred_fallthru
      _
    %p313 = scmp.le.s32.totalorder 1, %s15
    %p314 = scmp.lt.s32.totalorder %s15, 3
    %p315 = pnand %p313, %p314
    %p316 = pneg %p315
    // Predicated region
    $region53: #{wav2vec2_forward.1} parent=5 // pred_check
      _
    $region54: #{wav2vec2_forward.1} parent=5 // pred_check_branch
      %318 = sbr.rel (%p315) target = $region56
    $region55: #{wav2vec2_forward.1} parent=5 // pred_region
      %s319 = ssub.s32 %s15, 1
      %p320 = scmp.lt.s32.totalorder %s20, 1
      %s321 = scalar_select %p320, %s20, 1
      %s322 = smul.addr %s321, 4
      %s323 = scalar_lea.vmem %s0, %s322
      %p324 = pneg %p41
      %p325 = pneg %p38
      %p326 = pneg %p62
      %p327 = pneg %p59
      %p328 = pneg %p83
      %p329 = pneg %p80
      %p330 = scmp.lt.s32.totalorder %s20, 1
      %s331 = scalar_select %p330, %s20, 1
      %s332 = smul.addr %s331, 8
      %s333 = scalar_lea.vmem %s3, %s332
      %p334 = pneg %p109
      %p335 = pneg %p106
      %p336 = pneg %p130
      %p337 = pneg %p127
      %p338 = pneg %p151
      %p339 = pneg %p148
      %p340 = pneg %p172
      %p341 = pneg %p169
      %p342 = scmp.lt.s32.totalorder %s20, 1
      %s343 = scalar_select %p342, %s20, 1
      %s344 = smul.addr %s343, 24
      %s345 = smul.addr %s344, 8
      %s346 = scalar_lea.vmem %s7, %s345
      %p347 = pneg %p198
      %p348 = pneg %p195
      %p349 = scmp.lt.s32.totalorder %s20, 1
      %s350 = scalar_select %p349, %s20, 1
      %s351 = smul.addr %s350, 8
      %s352 = scalar_lea.vmem %s8, %s351
      %p353 = pneg %p224
      %p354 = pneg %p221
      %p355 = pneg %p250
      %p356 = pneg %p247
      %p357 = scmp.lt.s32.totalorder %s20, 1
      %s358 = scalar_select %p357, %s20, 1
      %s359 = smul.addr %s358, 8
      %s360 = scalar_lea.vmem %s9, %s359
      %p361 = scmp.lt.s32.totalorder %s20, 1
      %s362 = scalar_select %p361, %s20, 1
      %s363 = smul.addr %s362, 4
      %s364 = scalar_lea.vmem %s0, %s363
      %p365 = scmp.lt.s32.totalorder %s20, 1
      %s366 = scalar_select %p365, %s20, 1
      %s367 = smul.addr %s366, 8
      %s368 = scalar_lea.vmem %s3, %s367
      %p369 = scmp.lt.s32.totalorder %s20, 1
      %s370 = scalar_select %p369, %s20, 1
      %s371 = smul.addr %s370, 24
      %s372 = smul.addr %s371, 8
      %s373 = scalar_lea.vmem %s7, %s372
      %p374 = scmp.lt.s32.totalorder %s20, 1
      %s375 = scalar_select %p374, %s20, 1
      %s376 = smul.addr %s375, 8
      %s377 = scalar_lea.vmem %s8, %s376
      %p378 = scmp.lt.s32.totalorder %s20, 1
      %s379 = scalar_select %p378, %s20, 1
      %s380 = smul.addr %s379, 8
      %s381 = scalar_lea.vmem %s9, %s380
      %v383 = vld [vmem:[%s364] sm:$0xf]
      %v384 = vld [vmem:[%s1] sm:$0xf]
      %v385 = vld [vmem:[%s2] sm:$0x1]
      %v387 = vlaneseq
      %v388 = vshrl.u32 %v387, 7
      %v389 = vsub.s32 0, %v388
      %v390 = vrot.slane %v385, %v389
      %vm392 = vcmask 64512
      %v394 = vsel %vm392, %v383, 0
      %vm396 = vcmask 1043456
      %v398 = vsel %vm396, %v384, 0
      %400 = vmatprep.subr.bf16.mxu0 0
      %401 = vmatpush1.bf16.msra.mxu0 %v398
      %402 = vmatprep.subr.bf16.mxu0 0
      %403 = vmatpush1.bf16.msra.mxu0 0
      %404 = vmatprep.subr.bf16.mxu0 0
      %405 = vmatpush1.bf16.msra.mxu0 0
      %406 = vmatprep.subr.bf16.mxu0 0
      %407 = vmatpush1.bf16.msra.mxu0 0
      %408 = vmatprep.subr.bf16.mxu0 0
      %409 = vmatpush1.bf16.msra.mxu0 0
      %410 = vmatprep.subr.bf16.mxu0 0
      %411 = vmatpush1.bf16.msra.mxu0 0
      %412 = vmatprep.subr.bf16.mxu0 0
      %413 = vmatpush1.bf16.msra.mxu0 0
      %414 = vmatprep.subr.bf16.mxu0 0
      %415 = vmatpush1.bf16.msra.mxu0 0
      %416 = vmatprep.subr.bf16.mxu0 0
      %417 = vmatpush1.bf16.msra.mxu0 0
      %418 = vmatprep.subr.bf16.mxu0 0
      %419 = vmatpush1.bf16.msra.mxu0 0
      %420 = vmatprep.subr.bf16.mxu0 0
      %421 = vmatpush1.bf16.msra.mxu0 0
      %422 = vmatprep.subr.bf16.mxu0 0
      %423 = vmatpush1.bf16.msra.mxu0 0
      %424 = vmatprep.subr.bf16.mxu0 0
      %425 = vmatpush1.bf16.msra.mxu0 0
      %426 = vmatprep.subr.bf16.mxu0 0
      %427 = vmatpush1.bf16.msra.mxu0 0
      %428 = vmatprep.subr.bf16.mxu0 0
      %429 = vmatpush1.bf16.msra.mxu0 0
      %430 = vmatprep.subr.bf16.mxu0 0
      %431 = vmatpush1.bf16.msra.mxu0 0
      %432 = vmatprep.mubr.bf16.mxu0 0
      %433 = vmatmul.mubr.bf16.gmra.mrb[0].mxu0 %v394
      %v434 = vpop.f32.mrb[0].mxu0
      %v435 = vadd.f32 %v390, %v434
      %v436 = vpop.f32.mrb[0].mxu0
      %v437 = vpop.f32.mrb[0].mxu0
      %v438 = vpop.f32.mrb[0].mxu0
      %439 = vdwg.mxu0
      %v440 = vmax.f32 %v435, 0.0
      %v441 = vld [vmem:[%s368] sm:$0xff]
      %vm442 = vcmp.gt.f32.partialorder %v441, 0.5
      %v443 = vld [vmem:[%s4] sm:$0x1]
      %v444 = vsel %vm442, 1, 0
      %445 = vset.pattern.permute.xlu0 0
      %446 = vperm.xlu0 %445, %v444
      %v447 = vpop.permute.xlu0 %446
      %vm448 = vcmp.eq.s32.totalorder %v447, 1
      %v450 = vlaneseq
      %v451 = vshrl.u32 %v450, 7
      %v452 = vsub.s32 0, %v451
      %v453 = vrot.slane %v443, %v452
      %v455 = vsel %vm448, %v453, %v440
      %v456 = vpack.c.bf16 %v455, %v455
      %v457 = vld [vmem:[%s5] sm:$0xf]
      %v458 = vld [vmem:[%s5 + $0x4] sm:$0xf]
      %v459 = vld [vmem:[%s5 + $0x8] sm:$0xf]
      %v460 = vld [vmem:[%s5 + $0xc] sm:$0xf]
      %v461 = vld [vmem:[%s6] sm:$0x1]
      %v463 = vlaneseq
      %v464 = vshrl.u32 %v463, 7
      %v465 = vsub.s32 0, %v464
      %v466 = vrot.slane %v461, %v465
      %v472 = vunpack.c.l.b16 %v457
      %v473 = vunpack.c.l.b16 %v458
      %v474 = vunpack.c.l.b16 %v459
      %v475 = vunpack.c.l.b16 %v460
      %v476 = vpack.c.b16 %v473, %v472
      %v477 = vpack.c.b16 %v475, %v474
      %vm480 = vcmask 261120
      %v482 = vsel %vm480, %v456, 0
      %484 = vmatprep.subr.bf16.mxu0 0
      %485 = vmatpush1.bf16.msra.mxu0 %v476
      %486 = vmatprep.subr.bf16.mxu0 0
      %487 = vmatpush1.bf16.msra.mxu0 %v477
      %488 = vmatprep.subr.bf16.mxu0 0
      %489 = vmatpush1.bf16.msra.mxu0 0
      %490 = vmatprep.subr.bf16.mxu0 0
      %491 = vmatpush1.bf16.msra.mxu0 0
      %492 = vmatprep.subr.bf16.mxu0 0
      %493 = vmatpush1.bf16.msra.mxu0 0
      %494 = vmatprep.subr.bf16.mxu0 0
      %495 = vmatpush1.bf16.msra.mxu0 0
      %496 = vmatprep.subr.bf16.mxu0 0
      %497 = vmatpush1.bf16.msra.mxu0 0
      %498 = vmatprep.subr.bf16.mxu0 0
      %499 = vmatpush1.bf16.msra.mxu0 0
      %500 = vmatprep.subr.bf16.mxu0 0
      %501 = vmatpush1.bf16.msra.mxu0 0
      %502 = vmatprep.subr.bf16.mxu0 0
      %503 = vmatpush1.bf16.msra.mxu0 0
      %504 = vmatprep.subr.bf16.mxu0 0
      %505 = vmatpush1.bf16.msra.mxu0 0
      %506 = vmatprep.subr.bf16.mxu0 0
      %507 = vmatpush1.bf16.msra.mxu0 0
      %508 = vmatprep.subr.bf16.mxu0 0
      %509 = vmatpush1.bf16.msra.mxu0 0
      %510 = vmatprep.subr.bf16.mxu0 0
      %511 = vmatpush1.bf16.msra.mxu0 0
      %512 = vmatprep.subr.bf16.mxu0 0
      %513 = vmatpush1.bf16.msra.mxu0 0
      %514 = vmatprep.subr.bf16.mxu0 0
      %515 = vmatpush1.bf16.msra.mxu0 0
      %516 = vmatprep.mubr.bf16.mxu0 0
      %517 = vmatmul.mubr.bf16.gmra.mrb[0].mxu0 %v482
      %v518 = vpop.f32.mrb[0].mxu0
      %v519 = vadd.f32 %v466, %v518
      %v520 = vpop.f32.mrb[0].mxu0
      %v521 = vpop.f32.mrb[0].mxu0
      %v522 = vpop.f32.mrb[0].mxu0
      %523 = vdwg.mxu0
      %v525 = vsel %vm480, %v440, 0
      %527 = vmatprep.subr.mxu0 0.0
      %528 = vmatpush1.xpose.msra.mxu0 %v525
      %529 = vmatprep.subr.mxu0 0.0
      %530 = vmatpush1.xpose.msra.mxu0 0.0
      %531 = vmatprep.subr.mxu0 0.0
      %532 = vmatpush1.xpose.msra.mxu0 0.0
      %533 = vmatprep.subr.mxu0 0.0
      %534 = vmatpush1.xpose.msra.mxu0 0.0
      %535 = vmatprep.subr.mxu0 0.0
      %536 = vmatpush1.xpose.msra.mxu0 0.0
      %537 = vmatprep.subr.mxu0 0.0
      %538 = vmatpush1.xpose.msra.mxu0 0.0
      %539 = vmatprep.subr.mxu0 0.0
      %540 = vmatpush1.xpose.msra.mxu0 0.0
      %541 = vmatprep.subr.mxu0 0.0
      %542 = vmatpush1.xpose.msra.mxu0 0.0
      %543 = vmatprep.subr.mxu0 0.0
      %544 = vmatpush1.xpose.msra.mxu0 0.0
      %545 = vmatprep.subr.mxu0 0.0
      %546 = vmatpush1.xpose.msra.mxu0 0.0
      %547 = vmatprep.subr.mxu0 0.0
      %548 = vmatpush1.xpose.msra.mxu0 0.0
      %549 = vmatprep.subr.mxu0 0.0
      %550 = vmatpush1.xpose.msra.mxu0 0.0
      %551 = vmatprep.subr.mxu0 0.0
      %552 = vmatpush1.xpose.msra.mxu0 0.0
      %553 = vmatprep.subr.mxu0 0.0
      %554 = vmatpush1.xpose.msra.mxu0 0.0
      %555 = vmatprep.subr.mxu0 0.0
      %556 = vmatpush1.xpose.msra.mxu0 0.0
      %557 = vmatprep.subr.mxu0 0.0
      %558 = vmatpush1.xpose.msra.mxu0 0.0
      %559 = vmatprep.subr.mxu0 0.0
      %560 = vmatpush1.xpose.msra.mxu0 0.0
      %561 = vmatprep.subr.mxu0 0.0
      %562 = vmatpush1.xpose.msra.mxu0 0.0
      %563 = vmatprep.subr.mxu0 0.0
      %564 = vmatpush1.xpose.msra.mxu0 0.0
      %565 = vmatprep.subr.mxu0 0.0
      %566 = vmatpush1.xpose.msra.mxu0 0.0
      %567 = vmatprep.subr.mxu0 0.0
      %568 = vmatpush1.xpose.msra.mxu0 0.0
      %569 = vmatprep.subr.mxu0 0.0
      %570 = vmatpush1.xpose.msra.mxu0 0.0
      %571 = vmatprep.subr.mxu0 0.0
      %572 = vmatpush1.xpose.msra.mxu0 0.0
      %573 = vmatprep.subr.mxu0 0.0
      %574 = vmatpush1.xpose.msra.mxu0 0.0
      %575 = vmatprep.subr.mxu0 0.0
      %576 = vmatpush1.xpose.msra.mxu0 0.0
      %577 = vmatprep.subr.mxu0 0.0
      %578 = vmatpush1.xpose.msra.mxu0 0.0
      %579 = vmatprep.subr.mxu0 0.0
      %580 = vmatpush1.xpose.msra.mxu0 0.0
      %581 = vmatprep.subr.mxu0 0.0
      %582 = vmatpush1.xpose.msra.mxu0 0.0
      %583 = vmatprep.subr.mxu0 0.0
      %584 = vmatpush1.xpose.msra.mxu0 0.0
      %585 = vmatprep.subr.mxu0 0.0
      %586 = vmatpush1.xpose.msra.mxu0 0.0
      %587 = vmatprep.subr.mxu0 0.0
      %588 = vmatpush1.xpose.msra.mxu0 0.0
      %589 = vmatprep.subr.mxu0 0.0
      %590 = vmatpush1.xpose.msra.mxu0 0.0
      %591 = vmatprep.mubr.f32.mxu0 0.0
      %592 = vmatmul.mubr.f32.gmra.mrb[0].mxu0 %v525
      %v593 = vpop.f32.mrb[0].mxu0
      %v594 = vadd.f32 0.0, %v593
      %v595 = vpop.f32.mrb[0].mxu0
      %596 = vdwg.mxu0
      %v597 = vld [vmem:[%s373] sm:$0xff]
      %v598 = vld [vmem:[%s373 + $0x8] sm:$0xff]
      %v599 = vld [vmem:[%s373 + $0x10] sm:$0xf]
      %v600 = vld [vmem:[%s373 + $0x18] sm:$0xff]
      %v601 = vld [vmem:[%s373 + $0x20] sm:$0xff]
      %v602 = vld [vmem:[%s373 + $0x28] sm:$0xf]
      %v603 = vld [vmem:[%s373 + $0x30] sm:$0xff]
      %v604 = vld [vmem:[%s373 + $0x38] sm:$0xff]
      %v605 = vld [vmem:[%s373 + $0x40] sm:$0xf]
      %v606 = vld [vmem:[%s373 + $0x48] sm:$0xff]
      %v607 = vld [vmem:[%s373 + $0x50] sm:$0xff]
      %v608 = vld [vmem:[%s373 + $0x58] sm:$0xf]
      %v609 = vld [vmem:[%s373 + $0x60] sm:$0xff]
      %v610 = vld [vmem:[%s373 + $0x68] sm:$0xff]
      %v611 = vld [vmem:[%s373 + $0x70] sm:$0xf]
      %v612 = vld [vmem:[%s373 + $0x78] sm:$0xff]
      %v613 = vld [vmem:[%s373 + $0x80] sm:$0xff]
      %v614 = vld [vmem:[%s373 + $0x88] sm:$0xf]
      %v615 = vld [vmem:[%s373 + $0x90] sm:$0xff]
      %v616 = vld [vmem:[%s373 + $0x98] sm:$0xff]
      %v617 = vld [vmem:[%s373 + $0xa0] sm:$0xf]
      %v618 = vld [vmem:[%s373 + $0xa8] sm:$0xff]
      %v619 = vld [vmem:[%s373 + $0xb0] sm:$0xff]
      %v620 = vld [vmem:[%s373 + $0xb8] sm:$0xf]
      %v622 = vcombine.high %v594, %v594
      %v624 = vunpack.c.l.s4 1966171168
      %v625 = vunpack.c.0.s8 %v624
      %v626 = vlaneseq
      %v627 = vshrl.u32 %v626, 7
      %v628 = vsub.s32 %v625, %v627
      %v629 = vrot.slane %v594, %v628
      %v631 = vunpack.c.l.s4 1966171168
      %v632 = vunpack.c.0.s8 %v631
      %v633 = vlaneseq
      %v634 = vshrl.u32 %v633, 7
      %v635 = vsub.s32 %v632, %v634
      %v636 = vrot.slane %v622, %v635
      %v637 = vcombine.high %v629, %v629
      %v638 = vcombine.high %v636, %v636
      %v640 = vunpack.c.l.s4 1966171168
      %v641 = vunpack.c.0.s8 %v640
      %v642 = vlaneseq
      %v643 = vshrl.u32 %v642, 7
      %v644 = vsub.s32 %v641, %v643
      %v645 = vrot.slane %v629, %v644
      %v647 = vunpack.c.l.s4 1966171168
      %v648 = vunpack.c.0.s8 %v647
      %v649 = vlaneseq
      %v650 = vshrl.u32 %v649, 7
      %v651 = vsub.s32 %v648, %v650
      %v652 = vrot.slane %v636, %v651
      %v654 = vunpack.c.l.s4 1966171168
      %v655 = vunpack.c.0.s8 %v654
      %v656 = vlaneseq
      %v657 = vshrl.u32 %v656, 7
      %v658 = vsub.s32 %v655, %v657
      %v659 = vrot.slane %v637, %v658
      %v661 = vunpack.c.l.s4 1966171168
      %v662 = vunpack.c.0.s8 %v661
      %v663 = vlaneseq
      %v664 = vshrl.u32 %v663, 7
      %v665 = vsub.s32 %v662, %v664
      %v666 = vrot.slane %v638, %v665
      %v667 = vcombine.high %v645, %v645
      %v668 = vcombine.high %v652, %v652
      %v669 = vcombine.high %v659, %v659
      %v670 = vcombine.high %v666, %v666
      %v671 = vlaneseq
      %v672 = vshrl.u32 %v671, 7
      %v673 = vsub.s32 0, %v672
      %v674 = vrot.slane %v645, %v673
      %v675 = vlaneseq
      %v676 = vshrl.u32 %v675, 7
      %v677 = vsub.s32 0, %v676
      %v678 = vrot.slane %v659, %v677
      %v679 = vlaneseq
      %v680 = vshrl.u32 %v679, 7
      %v681 = vsub.s32 0, %v680
      %v682 = vrot.slane %v667, %v681
      %v683 = vlaneseq
      %v684 = vshrl.u32 %v683, 7
      %v685 = vsub.s32 0, %v684
      %v686 = vrot.slane %v669, %v685
      %v687 = vlaneseq
      %v688 = vshrl.u32 %v687, 7
      %v689 = vsub.s32 0, %v688
      %v690 = vrot.slane %v652, %v689
      %v691 = vlaneseq
      %v692 = vshrl.u32 %v691, 7
      %v693 = vsub.s32 0, %v692
      %v694 = vrot.slane %v666, %v693
      %v695 = vlaneseq
      %v696 = vshrl.u32 %v695, 7
      %v697 = vsub.s32 0, %v696
      %v698 = vrot.slane %v668, %v697
      %v699 = vlaneseq
      %v700 = vshrl.u32 %v699, 7
      %v701 = vsub.s32 0, %v700
      %v702 = vrot.slane %v670, %v701
      %v711 = vmul.f32 %v597, %v674
      %v712 = vmul.f32 %v598, %v674
      %v713 = vmul.f32 %v599, %v674
      %v714 = vmul.f32 %v600, %v678
      %v715 = vmul.f32 %v601, %v678
      %v716 = vmul.f32 %v602, %v678
      %v717 = vmul.f32 %v603, %v682
      %v718 = vmul.f32 %v604, %v682
      %v719 = vmul.f32 %v605, %v682
      %v720 = vmul.f32 %v606, %v686
      %v721 = vmul.f32 %v607, %v686
      %v722 = vmul.f32 %v608, %v686
      %v723 = vmul.f32 %v609, %v690
      %v724 = vmul.f32 %v610, %v690
      %v725 = vmul.f32 %v611, %v690
      %v726 = vmul.f32 %v612, %v694
      %v727 = vmul.f32 %v613, %v694
      %v728 = vmul.f32 %v614, %v694
      %v729 = vmul.f32 %v615, %v698
      %v730 = vmul.f32 %v616, %v698
      %v731 = vmul.f32 %v617, %v698
      %v732 = vmul.f32 %v618, %v702
      %v733 = vmul.f32 %v619, %v702
      %v734 = vmul.f32 %v620, %v702
      %v735 = vsel %vm392, %v711, 0.0
      %736 = vadd.xlane.f32.xlu0 %v735
      %v737 = vpop.xlane.xlu0 %736
      %v738 = vsel %vm392, %v712, 0.0
      %739 = vadd.xlane.f32.xlu0 %v738
      %v740 = vpop.xlane.xlu0 %739
      %vm741 = vcmask 60416
      %v742 = vsel %vm741, %v713, 0.0
      %743 = vadd.xlane.f32.xlu0 %v742
      %v744 = vpop.xlane.xlu0 %743
      %v745 = vsel %vm392, %v714, 0.0
      %746 = vadd.xlane.f32.xlu0 %v745
      %v747 = vpop.xlane.xlu0 %746
      %v748 = vsel %vm392, %v715, 0.0
      %749 = vadd.xlane.f32.xlu0 %v748
      %v750 = vpop.xlane.xlu0 %749
      %v751 = vsel %vm741, %v716, 0.0
      %752 = vadd.xlane.f32.xlu0 %v751
      %v753 = vpop.xlane.xlu0 %752
      %v754 = vsel %vm392, %v717, 0.0
      %755 = vadd.xlane.f32.xlu0 %v754
      %v756 = vpop.xlane.xlu0 %755
      %v757 = vsel %vm392, %v718, 0.0
      %758 = vadd.xlane.f32.xlu0 %v757
      %v759 = vpop.xlane.xlu0 %758
      %v760 = vsel %vm741, %v719, 0.0
      %761 = vadd.xlane.f32.xlu0 %v760
      %v762 = vpop.xlane.xlu0 %761
      %v763 = vsel %vm392, %v720, 0.0
      %764 = vadd.xlane.f32.xlu0 %v763
      %v765 = vpop.xlane.xlu0 %764
      %v766 = vsel %vm392, %v721, 0.0
      %767 = vadd.xlane.f32.xlu0 %v766
      %v768 = vpop.xlane.xlu0 %767
      %v769 = vsel %vm741, %v722, 0.0
      %770 = vadd.xlane.f32.xlu0 %v769
      %v771 = vpop.xlane.xlu0 %770
      %v772 = vsel %vm392, %v723, 0.0
      %773 = vadd.xlane.f32.xlu0 %v772
      %v774 = vpop.xlane.xlu0 %773
      %v775 = vsel %vm392, %v724, 0.0
      %776 = vadd.xlane.f32.xlu0 %v775
      %v777 = vpop.xlane.xlu0 %776
      %v778 = vsel %vm741, %v725, 0.0
      %779 = vadd.xlane.f32.xlu0 %v778
      %v780 = vpop.xlane.xlu0 %779
      %v781 = vsel %vm392, %v726, 0.0
      %782 = vadd.xlane.f32.xlu0 %v781
      %v783 = vpop.xlane.xlu0 %782
      %v784 = vsel %vm392, %v727, 0.0
      %785 = vadd.xlane.f32.xlu0 %v784
      %v786 = vpop.xlane.xlu0 %785
      %v787 = vsel %vm741, %v728, 0.0
      %788 = vadd.xlane.f32.xlu0 %v787
      %v789 = vpop.xlane.xlu0 %788
      %v790 = vsel %vm392, %v729, 0.0
      %791 = vadd.xlane.f32.xlu0 %v790
      %v792 = vpop.xlane.xlu0 %791
      %v793 = vsel %vm392, %v730, 0.0
      %794 = vadd.xlane.f32.xlu0 %v793
      %v795 = vpop.xlane.xlu0 %794
      %v796 = vsel %vm741, %v731, 0.0
      %797 = vadd.xlane.f32.xlu0 %v796
      %v798 = vpop.xlane.xlu0 %797
      %v799 = vsel %vm392, %v732, 0.0
      %800 = vadd.xlane.f32.xlu0 %v799
      %v801 = vpop.xlane.xlu0 %800
      %v802 = vsel %vm392, %v733, 0.0
      %803 = vadd.xlane.f32.xlu0 %v802
      %v804 = vpop.xlane.xlu0 %803
      %v805 = vsel %vm741, %v734, 0.0
      %806 = vadd.xlane.f32.xlu0 %v805
      %v807 = vpop.xlane.xlu0 %806
      %v808 = vlaneseq
      %v809 = vshrl.u32 %v808, 7
      %v810 = vlaneseq
      %v811 = vand.u32 %v810, 127
      %vm812 = vcmp.eq.s32.totalorder %v809, %v811
      %v813 = vsel %vm812, %v594, 0.0
      %v814 = vsel %vm392, %v813, 0.0
      %v815 = vrot.slane %v814, 4
      %v816 = vadd.f32 %v814, %v815
      %v817 = vrot.slane %v816, 2
      %v818 = vadd.f32 %v816, %v817
      %v819 = vrot.slane %v818, 1
      %v820 = vadd.f32 %v818, %v819
      %v821 = vmul.f32 %v597, %v820
      %v822 = vmul.f32 %v598, %v820
      %v823 = vmul.f32 %v599, %v820
      %v824 = vmul.f32 %v600, %v820
      %v825 = vmul.f32 %v601, %v820
      %v826 = vmul.f32 %v602, %v820
      %v827 = vmul.f32 %v603, %v820
      %v828 = vmul.f32 %v604, %v820
      %v829 = vmul.f32 %v605, %v820
      %v830 = vmul.f32 %v606, %v820
      %v831 = vmul.f32 %v607, %v820
      %v832 = vmul.f32 %v608, %v820
      %v833 = vmul.f32 %v609, %v820
      %v834 = vmul.f32 %v610, %v820
      %v835 = vmul.f32 %v611, %v820
      %v836 = vmul.f32 %v612, %v820
      %v837 = vmul.f32 %v613, %v820
      %v838 = vmul.f32 %v614, %v820
      %v839 = vmul.f32 %v615, %v820
      %v840 = vmul.f32 %v616, %v820
      %v841 = vmul.f32 %v617, %v820
      %v842 = vmul.f32 %v618, %v820
      %v843 = vmul.f32 %v619, %v820
      %v844 = vmul.f32 %v620, %v820
      %v845 = vsel %vm392, %v821, 0.0
      %846 = vadd.xlane.f32.xlu0 %v845
      %v847 = vpop.xlane.xlu0 %846
      %v848 = vsel %vm392, %v822, 0.0
      %849 = vadd.xlane.f32.xlu0 %v848
      %v850 = vpop.xlane.xlu0 %849
      %v851 = vsel %vm741, %v823, 0.0
      %852 = vadd.xlane.f32.xlu0 %v851
      %v853 = vpop.xlane.xlu0 %852
      %v854 = vsel %vm392, %v824, 0.0
      %855 = vadd.xlane.f32.xlu0 %v854
      %v856 = vpop.xlane.xlu0 %855
      %v857 = vsel %vm392, %v825, 0.0
      %858 = vadd.xlane.f32.xlu0 %v857
      %v859 = vpop.xlane.xlu0 %858
      %v860 = vsel %vm741, %v826, 0.0
      %861 = vadd.xlane.f32.xlu0 %v860
      %v862 = vpop.xlane.xlu0 %861
      %v863 = vsel %vm392, %v827, 0.0
      %864 = vadd.xlane.f32.xlu0 %v863
      %v865 = vpop.xlane.xlu0 %864
      %v866 = vsel %vm392, %v828, 0.0
      %867 = vadd.xlane.f32.xlu0 %v866
      %v868 = vpop.xlane.xlu0 %867
      %v869 = vsel %vm741, %v829, 0.0
      %870 = vadd.xlane.f32.xlu0 %v869
      %v871 = vpop.xlane.xlu0 %870
      %v872 = vsel %vm392, %v830, 0.0
      %873 = vadd.xlane.f32.xlu0 %v872
      %v874 = vpop.xlane.xlu0 %873
      %v875 = vsel %vm392, %v831, 0.0
      %876 = vadd.xlane.f32.xlu0 %v875
      %v877 = vpop.xlane.xlu0 %876
      %v878 = vsel %vm741, %v832, 0.0
      %879 = vadd.xlane.f32.xlu0 %v878
      %v880 = vpop.xlane.xlu0 %879
      %v881 = vsel %vm392, %v833, 0.0
      %882 = vadd.xlane.f32.xlu0 %v881
      %v883 = vpop.xlane.xlu0 %882
      %v884 = vsel %vm392, %v834, 0.0
      %885 = vadd.xlane.f32.xlu0 %v884
      %v886 = vpop.xlane.xlu0 %885
      %v887 = vsel %vm741, %v835, 0.0
      %888 = vadd.xlane.f32.xlu0 %v887
      %v889 = vpop.xlane.xlu0 %888
      %v890 = vsel %vm392, %v836, 0.0
      %891 = vadd.xlane.f32.xlu0 %v890
      %v892 = vpop.xlane.xlu0 %891
      %v893 = vsel %vm392, %v837, 0.0
      %894 = vadd.xlane.f32.xlu0 %v893
      %v895 = vpop.xlane.xlu0 %894
      %v896 = vsel %vm741, %v838, 0.0
      %897 = vadd.xlane.f32.xlu0 %v896
      %v898 = vpop.xlane.xlu0 %897
      %v899 = vsel %vm392, %v839, 0.0
      %900 = vadd.xlane.f32.xlu0 %v899
      %v901 = vpop.xlane.xlu0 %900
      %v902 = vsel %vm392, %v840, 0.0
      %903 = vadd.xlane.f32.xlu0 %v902
      %v904 = vpop.xlane.xlu0 %903
      %v905 = vsel %vm741, %v841, 0.0
      %906 = vadd.xlane.f32.xlu0 %v905
      %v907 = vpop.xlane.xlu0 %906
      %v908 = vsel %vm392, %v842, 0.0
      %909 = vadd.xlane.f32.xlu0 %v908
      %v910 = vpop.xlane.xlu0 %909
      %v911 = vsel %vm392, %v843, 0.0
      %912 = vadd.xlane.f32.xlu0 %v911
      %v913 = vpop.xlane.xlu0 %912
      %v914 = vsel %vm741, %v844, 0.0
      %915 = vadd.xlane.f32.xlu0 %v914
      %v916 = vpop.xlane.xlu0 %915
      %v917 = vmul.f32 %v440, %v440
      %v918 = vsel %vm480, %v917, 0.0
      %919 = vadd.xlane.f32.xlu0 %v918
      %v920 = vpop.xlane.xlu0 %919
      %v921 = vmul.f32 %v440, %v519
      %v922 = vsel %vm480, %v921, 0.0
      %923 = vadd.xlane.f32.xlu0 %v922
      %v924 = vpop.xlane.xlu0 %923
      %v925 = vmul.f32 %v519, %v519
      %v926 = vsel %vm480, %v925, 0.0
      %927 = vadd.xlane.f32.xlu0 %v926
      %v928 = vpop.xlane.xlu0 %927
      %v953 = vadd.s32 %v811, 4294967295
      %v954 = vlaneseq
      %v955 = vshrl.u32 %v954, 7
      %v956 = vsub.s32 %v953, %v955
      %v957 = vrot.slane %v737, %v956
      %v958 = vadd.s32 %v811, 4294967287
      %v959 = vlaneseq
      %v960 = vshrl.u32 %v959, 7
      %v961 = vsub.s32 %v958, %v960
      %v962 = vrot.slane %v740, %v961
      %vm963 = vcmask 138312
      %v964 = vsel %vm963, %v962, %v957
      %v965 = vadd.s32 %v811, 4294967279
      %v966 = vlaneseq
      %v967 = vshrl.u32 %v966, 7
      %v968 = vsub.s32 %v965, %v967
      %v969 = vrot.slane %v744, %v968
      %vm970 = vcmask 203912
      %v971 = vsel %vm970, %v969, %v964
      %v972 = vlaneseq
      %v973 = vshrl.u32 %v972, 7
      %v974 = vsub.s32 %v953, %v973
      %v975 = vrot.slane %v747, %v974
      %v976 = vlaneseq
      %v977 = vshrl.u32 %v976, 7
      %v978 = vsub.s32 %v958, %v977
      %v979 = vrot.slane %v750, %v978
      %v980 = vsel %vm963, %v979, %v975
      %v981 = vlaneseq
      %v982 = vshrl.u32 %v981, 7
      %v983 = vsub.s32 %v965, %v982
      %v984 = vrot.slane %v753, %v983
      %v985 = vsel %vm970, %v984, %v980
      %v986 = vlaneseq
      %v987 = vshrl.u32 %v986, 7
      %v988 = vsub.s32 %v953, %v987
      %v989 = vrot.slane %v756, %v988
      %v990 = vlaneseq
      %v991 = vshrl.u32 %v990, 7
      %v992 = vsub.s32 %v958, %v991
      %v993 = vrot.slane %v759, %v992
      %v994 = vsel %vm963, %v993, %v989
      %v995 = vlaneseq
      %v996 = vshrl.u32 %v995, 7
      %v997 = vsub.s32 %v965, %v996
      %v998 = vrot.slane %v762, %v997
      %v999 = vsel %vm970, %v998, %v994
      %v1000 = vlaneseq
      %v1001 = vshrl.u32 %v1000, 7
      %v1002 = vsub.s32 %v953, %v1001
      %v1003 = vrot.slane %v765, %v1002
      %v1004 = vlaneseq
      %v1005 = vshrl.u32 %v1004, 7
      %v1006 = vsub.s32 %v958, %v1005
      %v1007 = vrot.slane %v768, %v1006
      %v1008 = vsel %vm963, %v1007, %v1003
      %v1009 = vlaneseq
      %v1010 = vshrl.u32 %v1009, 7
      %v1011 = vsub.s32 %v965, %v1010
      %v1012 = vrot.slane %v771, %v1011
      %v1013 = vsel %vm970, %v1012, %v1008
      %v1014 = vlaneseq
      %v1015 = vshrl.u32 %v1014, 7
      %v1016 = vsub.s32 %v953, %v1015
      %v1017 = vrot.slane %v774, %v1016
      %v1018 = vlaneseq
      %v1019 = vshrl.u32 %v1018, 7
      %v1020 = vsub.s32 %v958, %v1019
      %v1021 = vrot.slane %v777, %v1020
      %v1022 = vsel %vm963, %v1021, %v1017
      %v1023 = vlaneseq
      %v1024 = vshrl.u32 %v1023, 7
      %v1025 = vsub.s32 %v965, %v1024
      %v1026 = vrot.slane %v780, %v1025
      %v1027 = vsel %vm970, %v1026, %v1022
      %v1028 = vlaneseq
      %v1029 = vshrl.u32 %v1028, 7
      %v1030 = vsub.s32 %v953, %v1029
      %v1031 = vrot.slane %v783, %v1030
      %v1032 = vlaneseq
      %v1033 = vshrl.u32 %v1032, 7
      %v1034 = vsub.s32 %v958, %v1033
      %v1035 = vrot.slane %v786, %v1034
      %v1036 = vsel %vm963, %v1035, %v1031
      %v1037 = vlaneseq
      %v1038 = vshrl.u32 %v1037, 7
      %v1039 = vsub.s32 %v965, %v1038
      %v1040 = vrot.slane %v789, %v1039
      %v1041 = vsel %vm970, %v1040, %v1036
      %v1042 = vlaneseq
      %v1043 = vshrl.u32 %v1042, 7
      %v1044 = vsub.s32 %v953, %v1043
      %v1045 = vrot.slane %v792, %v1044
      %v1046 = vlaneseq
      %v1047 = vshrl.u32 %v1046, 7
      %v1048 = vsub.s32 %v958, %v1047
      %v1049 = vrot.slane %v795, %v1048
      %v1050 = vsel %vm963, %v1049, %v1045
      %v1051 = vlaneseq
      %v1052 = vshrl.u32 %v1051, 7
      %v1053 = vsub.s32 %v965, %v1052
      %v1054 = vrot.slane %v798, %v1053
      %v1055 = vsel %vm970, %v1054, %v1050
      %v1056 = vlaneseq
      %v1057 = vshrl.u32 %v1056, 7
      %v1058 = vsub.s32 %v953, %v1057
      %v1059 = vrot.slane %v801, %v1058
      %v1060 = vlaneseq
      %v1061 = vshrl.u32 %v1060, 7
      %v1062 = vsub.s32 %v958, %v1061
      %v1063 = vrot.slane %v804, %v1062
      %v1064 = vsel %vm963, %v1063, %v1059
      %v1065 = vlaneseq
      %v1066 = vshrl.u32 %v1065, 7
      %v1067 = vsub.s32 %v965, %v1066
      %v1068 = vrot.slane %v807, %v1067
      %v1069 = vsel %vm970, %v1068, %v1064
      %vm1070 = vcmask 1041409
      %v1071 = vsel %vm1070, %v985, %v971
      %vm1072 = vcmask 1042434
      %v1073 = vsel %vm1072, %v999, %v1071
      %vm1074 = vcmask 1043459
      %v1075 = vsel %vm1074, %v1013, %v1073
      %vm1076 = vcmask 1044484
      %v1077 = vsel %vm1076, %v1027, %v1075
      %vm1078 = vcmask 1045509
      %v1079 = vsel %vm1078, %v1041, %v1077
      %vm1080 = vcmask 1046534
      %v1081 = vsel %vm1080, %v1055, %v1079
      %vm1082 = vcmask 1047559
      %v1083 = vsel %vm1082, %v1069, %v1081
      %vm1085 = vcmask 7168
      %v1086 = vsel %vm1085, %v924, %v1083
      %v1111 = vlaneseq
      %v1112 = vshrl.u32 %v1111, 7
      %v1113 = vsub.s32 %v953, %v1112
      %v1114 = vrot.slane %v847, %v1113
      %v1115 = vlaneseq
      %v1116 = vshrl.u32 %v1115, 7
      %v1117 = vsub.s32 %v958, %v1116
      %v1118 = vrot.slane %v850, %v1117
      %v1119 = vsel %vm963, %v1118, %v1114
      %v1120 = vlaneseq
      %v1121 = vshrl.u32 %v1120, 7
      %v1122 = vsub.s32 %v965, %v1121
      %v1123 = vrot.slane %v853, %v1122
      %v1124 = vsel %vm970, %v1123, %v1119
      %v1125 = vlaneseq
      %v1126 = vshrl.u32 %v1125, 7
      %v1127 = vsub.s32 %v953, %v1126
      %v1128 = vrot.slane %v856, %v1127
      %v1129 = vlaneseq
      %v1130 = vshrl.u32 %v1129, 7
      %v1131 = vsub.s32 %v958, %v1130
      %v1132 = vrot.slane %v859, %v1131
      %v1133 = vsel %vm963, %v1132, %v1128
      %v1134 = vlaneseq
      %v1135 = vshrl.u32 %v1134, 7
      %v1136 = vsub.s32 %v965, %v1135
      %v1137 = vrot.slane %v862, %v1136
      %v1138 = vsel %vm970, %v1137, %v1133
      %v1139 = vlaneseq
      %v1140 = vshrl.u32 %v1139, 7
      %v1141 = vsub.s32 %v953, %v1140
      %v1142 = vrot.slane %v865, %v1141
      %v1143 = vlaneseq
      %v1144 = vshrl.u32 %v1143, 7
      %v1145 = vsub.s32 %v958, %v1144
      %v1146 = vrot.slane %v868, %v1145
      %v1147 = vsel %vm963, %v1146, %v1142
      %v1148 = vlaneseq
      %v1149 = vshrl.u32 %v1148, 7
      %v1150 = vsub.s32 %v965, %v1149
      %v1151 = vrot.slane %v871, %v1150
      %v1152 = vsel %vm970, %v1151, %v1147
      %v1153 = vlaneseq
      %v1154 = vshrl.u32 %v1153, 7
      %v1155 = vsub.s32 %v953, %v1154
      %v1156 = vrot.slane %v874, %v1155
      %v1157 = vlaneseq
      %v1158 = vshrl.u32 %v1157, 7
      %v1159 = vsub.s32 %v958, %v1158
      %v1160 = vrot.slane %v877, %v1159
      %v1161 = vsel %vm963, %v1160, %v1156
      %v1162 = vlaneseq
      %v1163 = vshrl.u32 %v1162, 7
      %v1164 = vsub.s32 %v965, %v1163
      %v1165 = vrot.slane %v880, %v1164
      %v1166 = vsel %vm970, %v1165, %v1161
      %v1167 = vlaneseq
      %v1168 = vshrl.u32 %v1167, 7
      %v1169 = vsub.s32 %v953, %v1168
      %v1170 = vrot.slane %v883, %v1169
      %v1171 = vlaneseq
      %v1172 = vshrl.u32 %v1171, 7
      %v1173 = vsub.s32 %v958, %v1172
      %v1174 = vrot.slane %v886, %v1173
      %v1175 = vsel %vm963, %v1174, %v1170
      %v1176 = vlaneseq
      %v1177 = vshrl.u32 %v1176, 7
      %v1178 = vsub.s32 %v965, %v1177
      %v1179 = vrot.slane %v889, %v1178
      %v1180 = vsel %vm970, %v1179, %v1175
      %v1181 = vlaneseq
      %v1182 = vshrl.u32 %v1181, 7
      %v1183 = vsub.s32 %v953, %v1182
      %v1184 = vrot.slane %v892, %v1183
      %v1185 = vlaneseq
      %v1186 = vshrl.u32 %v1185, 7
      %v1187 = vsub.s32 %v958, %v1186
      %v1188 = vrot.slane %v895, %v1187
      %v1189 = vsel %vm963, %v1188, %v1184
      %v1190 = vlaneseq
      %v1191 = vshrl.u32 %v1190, 7
      %v1192 = vsub.s32 %v965, %v1191
      %v1193 = vrot.slane %v898, %v1192
      %v1194 = vsel %vm970, %v1193, %v1189
      %v1195 = vlaneseq
      %v1196 = vshrl.u32 %v1195, 7
      %v1197 = vsub.s32 %v953, %v1196
      %v1198 = vrot.slane %v901, %v1197
      %v1199 = vlaneseq
      %v1200 = vshrl.u32 %v1199, 7
      %v1201 = vsub.s32 %v958, %v1200
      %v1202 = vrot.slane %v904, %v1201
      %v1203 = vsel %vm963, %v1202, %v1198
      %v1204 = vlaneseq
      %v1205 = vshrl.u32 %v1204, 7
      %v1206 = vsub.s32 %v965, %v1205
      %v1207 = vrot.slane %v907, %v1206
      %v1208 = vsel %vm970, %v1207, %v1203
      %v1209 = vlaneseq
      %v1210 = vshrl.u32 %v1209, 7
      %v1211 = vsub.s32 %v953, %v1210
      %v1212 = vrot.slane %v910, %v1211
      %v1213 = vlaneseq
      %v1214 = vshrl.u32 %v1213, 7
      %v1215 = vsub.s32 %v958, %v1214
      %v1216 = vrot.slane %v913, %v1215
      %v1217 = vsel %vm963, %v1216, %v1212
      %v1218 = vlaneseq
      %v1219 = vshrl.u32 %v1218, 7
      %v1220 = vsub.s32 %v965, %v1219
      %v1221 = vrot.slane %v916, %v1220
      %v1222 = vsel %vm970, %v1221, %v1217
      %v1223 = vsel %vm1070, %v1138, %v1124
      %v1224 = vsel %vm1072, %v1152, %v1223
      %v1225 = vsel %vm1074, %v1166, %v1224
      %v1226 = vsel %vm1076, %v1180, %v1225
      %v1227 = vsel %vm1078, %v1194, %v1226
      %v1228 = vsel %vm1080, %v1208, %v1227
      %v1229 = vsel %vm1082, %v1222, %v1228
      %v1231 = vsel %vm1085, %v928, %v1229
      %v1232 = vmax.f32 %v920, 1e-16
      %v1233 = vmax.f32 %v1231, 1e-16
      %v1234 = vmul.f32 %v1232, %v1233
      %v1235 = vrsqrt.pop %v1234
      %v1236 = vmul.f32 %v1086, %v1235
      %v1237 = vmul.f32 %v1236, 10.0
      %v1238 = vld [vmem:[%s377] sm:$0xff]
      %vm1239 = vcmp.gt.f32.partialorder %v1238, 0.5
      %v1240 = vsel %vm1239, -inf, %v1237
      %1242 = vrot.lane.b32.xlu0 %v1240, 32
      %v1243 = vpop.permute.xlu0 %1242
      %v1245 = vsel %vm480, %v440, %v1243
      %vm1246 = vcmask 433152
      %v1247 = vsel %vm1246, %v1245, 0.0
      %1248 = vst [vmem:[%s381] sm:$0xff] %v1247
      %p1249 = scmp.lt.s32.totalorder %s20, 1
      %s1250 = scalar_select %p1249, %s20, 1
      %s1251 = smul.addr %s1250, 8
      %s1252 = scalar_lea.vmem %s9, %s1251
      // Predicated region
      $region57: #{wav2vec2_forward.1} parent=55 // pred_check
        %p1253 = pneg %p247
      $region58: #{wav2vec2_forward.1} parent=55 // pred_check_branch
        %1255 = sbr.rel (%p1253) target = $region60
      $region59: #{wav2vec2_forward.1} parent=55 // pred_region
        _
      $region60: #{wav2vec2_forward.1} parent=55 // pred_fallthru
        _
    $region56: #{wav2vec2_forward.1} parent=5 // pred_fallthru
      _
    %p1256 = scmp.le.s32.totalorder 2, %s15
    // Predicated region
    $region61: #{wav2vec2_forward.1} parent=5 // pred_check
      %p1257 = pneg %p1256
    $region62: #{wav2vec2_forward.1} parent=5 // pred_check_branch
      %1259 = sbr.rel (%p1257) target = $region64
    $region63: #{wav2vec2_forward.1} parent=5 // pred_region
      %s1260 = ssub.s32 %s15, 2
      // Predicated region
      $region65: #{wav2vec2_forward.1} parent=63 // pred_check
        %p1261 = pneg %p253
      $region66: #{wav2vec2_forward.1} parent=63 // pred_check_branch
        %1263 = sbr.rel (%p1261) target = $region68
      $region67: #{wav2vec2_forward.1} parent=63 // pred_region
        %p1264 = scmp.lt.s32.totalorder %s21, 1
        %s1265 = scalar_select %p1264, %s21, 1
        %s1266 = smul.addr %s1265, 8
        %s1267 = scalar_lea.vmem %s9, %s1266
      $region68: #{wav2vec2_forward.1} parent=63 // pred_fallthru
        _
    $region64: #{wav2vec2_forward.1} parent=5 // pred_fallthru
      _
  $region6: #{wav2vec2_forward.1} parent=0 // loop_footer
    %s19 = sadd.s32 1, %s15
  $region7: #{wav2vec2_forward.1} parent=0 // loop_footer_branch
    %14 = sbr.rel target = $region3
  $region8: #{wav2vec2_forward.1} parent=0 // loop_exit
    _

</llo_original>
